<compile_context>
chip_gen: v6e
topology: v6e:2x2x1
jax: 0.10.0
libtpu: 0.0.40
codegen_flags: <defaults>
</compile_context>

<pallas_src>
import math

import jax
import jax.numpy as jnp
from jax import lax
from jax.experimental import pallas as pl
from jax.experimental.pallas import tpu as pltpu


def _round_up(x: int, m: int) -> int:
    return (x + m - 1) // m * m


# ---------------------------------------------------------------------------
# Fast path: VMEM-resident table, one-hot MXU gather (small vocab only).
# ---------------------------------------------------------------------------
def _make_vmem_gather_kernel(tn: int, vocab: int, scale: float):
    def kernel(ids_ref, table_ref, out_ref):
        # ids_ref:   (tn, 1)      int32  VMEM block
        # table_ref: (vocab, emb)        VMEM (resident; same block every step)
        # out_ref:   (tn, emb)           VMEM output block
        ids = ids_ref[...]                                        # (tn, 1)
        iota = lax.broadcasted_iota(jnp.int32, (tn, vocab), 1)    # (tn, vocab)
        onehot = (iota == ids).astype(table_ref.dtype)
        gathered = jnp.dot(onehot, table_ref[...],
                           preferred_element_type=jnp.float32)
        out_ref[...] = (gathered * scale).astype(out_ref.dtype)

    return kernel


# ---------------------------------------------------------------------------
# General path: table in HBM, manual double-buffered row-DMA gather.
# ---------------------------------------------------------------------------
def _make_hbm_gather_kernel(tn: int, n_inner: int, scale: float, unroll: int):
    def kernel(ids_ref, table_hbm, out_ref, row_buf, sems):
        # ids_ref:   (n_pad,)       int32  SMEM (scalar prefetch)
        # table_hbm: (vocab, emb)          HBM ref (no auto-DMA)
        # out_ref:   (tn, emb)             VMEM output block
        # row_buf:   (2, tn, emb)          VMEM scratch (double-buffered gather)
        # sems:      (2,)                  DMA semaphores (one per slot)
        o = pl.program_id(0)
        i = pl.program_id(1)
        slot = i % 2

        def start_tile(tile_idx, s):
            base = tile_idx * tn

            def issue(r, carry):
                tok = ids_ref[base + r]
                pltpu.make_async_copy(
                    table_hbm.at[pl.ds(tok, 1), :],
                    row_buf.at[s, pl.ds(r, 1), :],
                    sems.at[s],
                ).start()
                return carry

            lax.fori_loop(0, tn, issue, 0, unroll=unroll)

        # Prime the pipeline at the start of every inner chunk (partition-safe:
        # the carry never crosses the "parallel" outer axis).
        @pl.when(i == 0)
        def _():
            start_tile(o * n_inner + i, slot)

        # Prefetch the next tile into the other slot; its DMAs overlap this
        # tile's wait + scale + writeback and the next step's descriptor issue.
        @pl.when(i + 1 < n_inner)
        def _():
            start_tile(o * n_inner + i + 1, 1 - slot)

        # One coalesced wait for all TN row copies of this slot: every row copy
        # signaled the same semaphore; the wait descriptor is sized to the full
        # slot buffer (tn rows x emb), matching the summed row-copy bytes.
        pltpu.make_async_copy(
            row_buf.at[slot], row_buf.at[slot], sems.at[slot]
        ).wait()

        # Single scaled pass scratch -> output block.
        out_ref[...] = (row_buf[slot].astype(jnp.float32) * scale).astype(out_ref.dtype)

    return kernel


def token_embedding(tokens: jax.Array, table: jax.Array, *,
                    tile_tokens: int = 512,
                    force_hbm_gather: bool = False) -> jax.Array:
    """tokens: int array (any shape), table: (vocab, emb) float array.

    Returns table[tokens] * sqrt(emb), i.e. torch Embedding(tokens) * sqrt(emb_size).
    Out-of-range ids are clamped to [0, vocab-1] (torch would raise).
    """
    vocab, emb = table.shape
    dtype = table.dtype
    isz = jnp.dtype(dtype).itemsize
    scale = math.sqrt(emb)

    tok_shape = tokens.shape
    n = 1
    for d in tok_shape:
        n *= int(d)

    # Layout-driven sizes.
    emb_lanes = _round_up(emb, 128)          # VMEM footprint of one row (lanes)
    sub = 8 * max(1, 4 // isz)               # sublane multiple for this dtype

    # Token tile: as big as a ~40 MiB VMEM budget for (2 scratch + 2 out) buffers
    # allows (v7x physical VMEM is 64 MiB), rounded to the sublane multiple.
    per_tok_bytes = 4 * emb_lanes * isz
    budget = 40 << 20
    tn = min(int(tile_tokens), max(sub, (budget // per_tok_bytes) // sub * sub))
    tn = min(tn, _round_up(n, sub))
    tn = max(sub, (tn // sub) * sub)

    raw_tiles = pl.cdiv(n, tn)
    # Outer "parallel" axis so v7x's two TensorCores each take a chunk; the
    # double-buffer carry lives only along the inner "arbitrary" axis.
    n_outer = 2 if raw_tiles >= 2 else 1
    n_inner = pl.cdiv(raw_tiles, n_outer)
    num_tiles = n_outer * n_inner
    n_pad = num_tiles * tn

    # Clamp ids (no unchecked OOB DMA / gather); pad with id 0 (rows sliced off).
    ids = jnp.clip(tokens.reshape(n).astype(jnp.int32), 0, vocab - 1)
    if n_pad != n:
        ids = jnp.pad(ids, (0, n_pad - n))

    # Fast path: small tables live entirely in VMEM; gather == one-hot matmul.
    table_tile_bytes = _round_up(vocab, 32) * emb_lanes * isz
    use_vmem_table = ((not force_hbm_gather)
                      and vocab <= 1024
                      and 2 * table_tile_bytes <= (8 << 20))

    if use_vmem_table:
        vmem_need = (2 * table_tile_bytes
                     + 2 * tn * emb_lanes * isz
                     + 2 * tn * 128 * 4)
        vmem_limit = int(min(max(vmem_need + (4 << 20), 32 << 20), 56 << 20))
        out_flat = pl.pallas_call(
            _make_vmem_gather_kernel(tn, vocab, scale),
            out_shape=jax.ShapeDtypeStruct((n_pad, emb), dtype),
            grid_spec=pltpu.PrefetchScalarGridSpec(
                num_scalar_prefetch=0,
                grid=(num_tiles,),
                in_specs=[
                    pl.BlockSpec((tn, 1), lambda t: (t, 0)),        # token ids
                    pl.BlockSpec((vocab, emb), lambda t: (0, 0)),   # resident table
                ],
                out_specs=pl.BlockSpec((tn, emb), lambda t: (t, 0)),
            ),
            compiler_params=pltpu.CompilerParams(
                dimension_semantics=("parallel",),
                vmem_limit_bytes=vmem_limit,
            ),
        )(ids.reshape(n_pad, 1), table)
    else:
        vmem_need = 4 * tn * emb_lanes * isz      # 2 scratch slots + 2 out buffers
        vmem_limit = int(min(max(vmem_need + (4 << 20), 32 << 20), 56 << 20))
        unroll = min(8, tn)
        out_flat = pl.pallas_call(
            _make_hbm_gather_kernel(tn, n_inner, scale, unroll),
            out_shape=jax.ShapeDtypeStruct((n_pad, emb), dtype),
            grid_spec=pltpu.PrefetchScalarGridSpec(
                num_scalar_prefetch=1,                  # ids -> SMEM
                grid=(n_outer, n_inner),
                in_specs=[
                    pl.BlockSpec(memory_space=pl.ANY),  # table stays in HBM
                ],
                out_specs=pl.BlockSpec(
                    (tn, emb), lambda o, i, ids: (o * n_inner + i, 0)),
                scratch_shapes=[
                    pltpu.VMEM((2, tn, emb), dtype),    # double-buffered rows
                    pltpu.SemaphoreType.DMA((2,)),      # one semaphore per slot
                ],
            ),
            compiler_params=pltpu.CompilerParams(
                dimension_semantics=("parallel", "arbitrary"),
                vmem_limit_bytes=vmem_limit,
            ),
        )(ids, table)

    return out_flat[:n].reshape(*tok_shape, emb)


if __name__ == "__main__":
    key = jax.random.PRNGKey(0)
    k1, k2, k3, k4 = jax.random.split(key, 4)

    # Config A: small shapes implied by the module (vocab=32, emb=32, batch=2, seq=8).
    vocab_a, emb_a, batch_a, seq_a = 32, 32, 2, 8
    table_a = jax.random.normal(k1, (vocab_a, emb_a), dtype=jnp.float32)
    tokens_a = jax.random.randint(k2, (batch_a, seq_a), 0, vocab_a, dtype=jnp.int32)
    ref_a = table_a[tokens_a] * math.sqrt(emb_a)

    out_a_fast = token_embedding(tokens_a, table_a)                         # VMEM fast path
    out_a_slow = token_embedding(tokens_a, table_a, force_hbm_gather=True)  # HBM DMA path
    jax.block_until_ready((out_a_fast, out_a_slow))
    assert out_a_fast.shape == (batch_a, seq_a, emb_a)
    assert jnp.allclose(out_a_fast, ref_a, atol=1e-5, rtol=1e-5)
    assert jnp.allclose(out_a_slow, ref_a, atol=1e-5, rtol=1e-5)

    # Config B: odd vocab, n not a multiple of the tile -> exercises id padding,
    # the (parallel, arbitrary) 2x3 grid and cross-step double buffering.
    vocab_b, emb_b, batch_b, seq_b = 37, 64, 2, 40
    table_b = jax.random.normal(k3, (vocab_b, emb_b), dtype=jnp.float32)
    tokens_b = jax.random.randint(k4, (batch_b, seq_b), 0, vocab_b, dtype=jnp.int32)
    ref_b = table_b[tokens_b] * math.sqrt(emb_b)

    out_b_fast = token_embedding(tokens_b, table_b, tile_tokens=16)
    out_b_slow = token_embedding(tokens_b, table_b, tile_tokens=16,
                                 force_hbm_gather=True)
    jax.block_until_ready((out_b_fast, out_b_slow))
    assert jnp.allclose(out_b_fast, ref_b, atol=1e-5, rtol=1e-5)
    assert jnp.allclose(out_b_slow, ref_b, atol=1e-5, rtol=1e-5)

    print("KERNEL_OK")
</pallas_src>

<mosaic_0001>
module attributes {stable_mosaic.version = 11 : i64} {
  func.func @kernel(%arg0: i32, %arg1: memref<16x1xi32, #tpu.memory_space<vmem>>, %arg2: memref<32x32xf32, #tpu.memory_space<vmem>>, %arg3: memref<16x32xf32, #tpu.memory_space<vmem>>) attributes {dimension_semantics = [#tpu.dimension_semantics<parallel>], iteration_bounds = array<i64: 1>, scalar_prefetch = 0 : i64, scratch_operands = 0 : i64, tpu.core_type = #tpu.core_type<tc>, window_params = [{transform_indices = @transform_0, window_bounds = array<i64: 16, 1>}, {pipeline_mode = #tpu.pipeline_mode<synchronous>, transform_indices = @transform_1, window_bounds = array<i64: 32, 32>}, {transform_indices = @transform_2, window_bounds = array<i64: 16, 32>}]} {
    %c0 = arith.constant 0 : index
    %c0_0 = arith.constant 0 : index
    %0 = vector.load %arg1[%c0, %c0_0] : memref<16x1xi32, #tpu.memory_space<vmem>>, vector<16x1xi32>
    %1 = tpu.iota {dimensions = array<i32: 1>} : vector<16x32xi32>
    %2 = vector.broadcast %0 : vector<16x1xi32> to vector<16x32xi32>
    %3 = arith.cmpi eq, %1, %2 : vector<16x32xi32>
    %4 = arith.extui %3 : vector<16x32xi1> to vector<16x32xi32>
    %5 = arith.sitofp %4 : vector<16x32xi32> to vector<16x32xf32>
    %c0_1 = arith.constant 0 : index
    %c0_2 = arith.constant 0 : index
    %6 = vector.load %arg2[%c0_1, %c0_2] : memref<32x32xf32, #tpu.memory_space<vmem>>, vector<32x32xf32>
    %cst = arith.constant dense<0.000000e+00> : vector<16x32xf32>
    %7 = tpu.matmul %5, %6, %cst {dimension_numbers = #tpu.dot_dimension_numbers<[1], [0], [0], [1], [0, 0, 1, 1], [], []>} : vector<16x32xf32>, vector<32x32xf32>, vector<16x32xf32> -> vector<16x32xf32>
    %cst_3 = arith.constant 5.65685415 : f32
    %8 = vector.broadcast %cst_3 : f32 to vector<16x32xf32>
    %9 = arith.mulf %7, %8 : vector<16x32xf32>
    %c0_4 = arith.constant 0 : index
    %c0_5 = arith.constant 0 : index
    %10 = vector.load %arg3[%c0_4, %c0_5] : memref<16x32xf32, #tpu.memory_space<vmem>>, vector<16x32xf32>
    tpu.vector_store %arg3[%c0_4, %c0_5], %9 {strides = array<i32>} : memref<16x32xf32, #tpu.memory_space<vmem>>, vector<16x32xf32>,
    return
  }
  func.func @transform_0(%arg0: i32) -> (i32, i32) {
    %c0_i32 = arith.constant 0 : i32
    %c0_i32_0 = arith.constant 0 : i32
    return %arg0, %c0_i32 : i32, i32
  }
  func.func @transform_1(%arg0: i32) -> (i32, i32) {
    %c0_i32 = arith.constant 0 : i32
    %c0_i32_0 = arith.constant 0 : i32
    %c0_i32_1 = arith.constant 0 : i32
    return %c0_i32, %c0_i32_0 : i32, i32
  }
  func.func @transform_2(%arg0: i32) -> (i32, i32) {
    %c0_i32 = arith.constant 0 : i32
    %c0_i32_0 = arith.constant 0 : i32
    return %arg0, %c0_i32 : i32, i32
  }
}

</mosaic_0001>

<llo_original>
// kernel: tpu_custom_call.1
$region0: #{tpu_custom_call.1}
  #allocation0 [shape = 'u32[]', space=smem, size = 0x4, offset = 0x4, fixed_abs, tag = 'smem constant byte address 0x4 - core index']
  #allocation1 [shape = 'u32[144,128]{1,0:T(1,128)}', space=vmem, size = 0x12000, scoped, tag = 'internal scratch']
  %s0 = inlined_call_operand.vmem [shape: s32[16,1], index: 0, kind: input, shape index: {}]
  %s1 = inlined_call_operand.hbm [shape: f32[32,32], index: 1, kind: input, shape index: {}]
  %s2 = inlined_call_operand.hbm [shape: f32[16,32], index: 2, kind: output, shape index: {}]
  %s3 = sld [smem:[#allocation0]]
  $region22: #{tpu_custom_call.1} parent=0
    _
  %s5 = ssub.s32 1, %s3
  %s6 = scalar_select 0, %s5, %s3
  $region1: #{tpu_custom_call.1} parent=0
    #allocation2 [shape = 'u8[16384]{0}', space=vmem, size = 0x4000, scoped, tag = 'input window, operand 1, single buffered']
    #allocation3 [shape = 's32[1]{0}', space=sflag, size = 0x4, scoped, tag = 'scoped memory for tpu_custom_call.1']
    #allocation4 [shape = 's32[1]{0}', space=sflag, size = 0x4, scoped, tag = 'scoped memory for tpu_custom_call.1']
    #allocation5 [shape = 'u8[8192]{0}', space=vmem, size = 0x2000, scoped, tag = 'output window, operand 0, single buffered']
    %7 = vsyncpa [#allocation3], 0
    %8 = vsyncpa [#allocation4], 0
    // Predicated region
    $region2: #{tpu_custom_call.1} parent=1 // pred_check
      _
    $region3: #{tpu_custom_call.1} parent=1 // pred_check_branch
      %10 = sbr.rel (0) target = $region5
    $region4: #{tpu_custom_call.1} parent=1 // pred_region
      _
    $region5: #{tpu_custom_call.1} parent=1 // pred_fallthru
      _
    // Predicated region
    $region6: #{tpu_custom_call.1} parent=1 // pred_check
      _
    $region7: #{tpu_custom_call.1} parent=1 // pred_check_branch
      %12 = sbr.rel (0) target = $region9
    $region8: #{tpu_custom_call.1} parent=1 // pred_region
      %s14 = ssub.s32 512, 512
      %15 = vsyncadd [#allocation3], %s14
      %s16 = sshll.u32 [#allocation2], 4
      %s17 = int_to_ptr.vmem [resolvable:$true] %s16
      %22 = dma.hbm_to_vmem [thread:$0]  %s1, 512, %s17, [#allocation3], 128, 128, 8
    $region9: #{tpu_custom_call.1} parent=1 // pred_fallthru
      _
    // Predicated region
    $region10: #{tpu_custom_call.1} parent=1 // pred_check
      _
    $region11: #{tpu_custom_call.1} parent=1 // pred_check_branch
      %24 = sbr.rel (0) target = $region13
    $region12: #{tpu_custom_call.1} parent=1 // pred_region
      %25 = dma.done [#allocation3], 512
    $region13: #{tpu_custom_call.1} parent=1 // pred_fallthru
      _
    %v26 = vld [vmem:[%s0] sm:$0xff]
    %v27 = vld [vmem:[%s0 + $0x8] sm:$0xff]
    %v28 = vlaneseq
    %v29 = vand.u32 %v28, 127
    %30 = vset.pattern.permute.xlu0 0
    %31 = vperm.xlu0 %30, %v26
    %v32 = vpop.permute.xlu0 %31
    %33 = vset.pattern.permute.xlu0 0
    %34 = vperm.xlu0 %33, %v27
    %v35 = vpop.permute.xlu0 %34
    %vm36 = vcmp.eq.s32.totalorder %v29, %v32
    %vm37 = vcmp.eq.s32.totalorder %v29, %v35
    %v38 = vsel %vm36, 1, 0
    %v39 = vsel %vm37, 1, 0
    %v40 = vcvt.s32.f32 %v38
    %v41 = vcvt.s32.f32 %v39
    %v42 = vld [vmem:[#allocation2] sm:$0xff]
    %v43 = vld [vmem:[#allocation2 + $0x8] sm:$0xff]
    %v44 = vld [vmem:[#allocation2 + $0x10] sm:$0xff]
    %v45 = vld [vmem:[#allocation2 + $0x18] sm:$0xff]
    %vm46 = vcmask 261120
    %v48 = vsel %vm46, %v40, 0
    %v51 = vsel %vm46, %v41, 0
    %53 = vmatprep.subr.mxu0 0.0
    %54 = vmatpush1.msra.mxu0 0.0
    %55 = vmatprep.subr.mxu0 0.0
    %56 = vmatpush1.msra.mxu0 0.0
    %57 = vmatprep.subr.mxu0 0.0
    %58 = vmatpush1.msra.mxu0 0.0
    %59 = vmatprep.subr.mxu0 0.0
    %60 = vmatpush1.msra.mxu0 0.0
    %61 = vmatprep.subr.mxu0 0.0
    %62 = vmatpush1.msra.mxu0 0.0
    %63 = vmatprep.subr.mxu0 0.0
    %64 = vmatpush1.msra.mxu0 0.0
    %65 = vmatprep.subr.mxu0 0.0
    %66 = vmatpush1.msra.mxu0 0.0
    %67 = vmatprep.subr.mxu0 0.0
    %68 = vmatpush1.msra.mxu0 0.0
    %69 = vmatprep.subr.mxu0 0.0
    %70 = vmatpush1.msra.mxu0 0.0
    %71 = vmatprep.subr.mxu0 0.0
    %72 = vmatpush1.msra.mxu0 0.0
    %73 = vmatprep.subr.mxu0 0.0
    %74 = vmatpush1.msra.mxu0 0.0
    %75 = vmatprep.subr.mxu0 0.0
    %76 = vmatpush1.msra.mxu0 0.0
    %77 = vmatprep.subr.mxu0 0.0
    %78 = vmatpush1.msra.mxu0 %v45
    %79 = vmatprep.subr.mxu0 0.0
    %80 = vmatpush1.msra.mxu0 %v44
    %81 = vmatprep.subr.mxu0 0.0
    %82 = vmatpush1.msra.mxu0 %v43
    %83 = vmatprep.subr.mxu0 0.0
    %84 = vmatpush1.msra.mxu0 %v42
    %85 = vmatprep.subr.mxu0 0.0
    %86 = vmatpush2.msra.mxu0 0.0
    %87 = vmatprep.subr.mxu0 0.0
    %88 = vmatpush2.msra.mxu0 0.0
    %89 = vmatprep.subr.mxu0 0.0
    %90 = vmatpush2.msra.mxu0 0.0
    %91 = vmatprep.subr.mxu0 0.0
    %92 = vmatpush2.msra.mxu0 0.0
    %93 = vmatprep.subr.mxu0 0.0
    %94 = vmatpush2.msra.mxu0 0.0
    %95 = vmatprep.subr.mxu0 0.0
    %96 = vmatpush2.msra.mxu0 0.0
    %97 = vmatprep.subr.mxu0 0.0
    %98 = vmatpush2.msra.mxu0 0.0
    %99 = vmatprep.subr.mxu0 0.0
    %100 = vmatpush2.msra.mxu0 0.0
    %101 = vmatprep.subr.mxu0 0.0
    %102 = vmatpush2.msra.mxu0 0.0
    %103 = vmatprep.subr.mxu0 0.0
    %104 = vmatpush2.msra.mxu0 0.0
    %105 = vmatprep.subr.mxu0 0.0
    %106 = vmatpush2.msra.mxu0 0.0
    %107 = vmatprep.subr.mxu0 0.0
    %108 = vmatpush2.msra.mxu0 0.0
    %109 = vmatprep.subr.mxu0 0.0
    %110 = vmatpush2.msra.mxu0 0.0
    %111 = vmatprep.subr.mxu0 0.0
    %112 = vmatpush2.msra.mxu0 0.0
    %113 = vmatprep.subr.mxu0 0.0
    %114 = vmatpush2.msra.mxu0 0.0
    %115 = vmatprep.subr.mxu0 0.0
    %116 = vmatpush2.msra.mxu0 0.0
    %117 = vmatprep.mubr.f32.mxu0 0.0
    %118 = vmatmul.mubr.f32.gmra.mxu0 %v48
    %v119 = vpop.f32.mrf.mxu0
    %v120 = vadd.f32 0.0, %v119
    %v121 = vpop.f32.mrf.mxu0
    %122 = vmatprep.mubr.f32.mxu0 0.0
    %123 = vmatmul.mubr.f32.gmra.mxu0 %v51
    %v124 = vpop.f32.mrf.mxu0
    %v125 = vadd.f32 0.0, %v124
    %v126 = vpop.f32.mrf.mxu0
    %127 = vdwg.mxu0
    %v128 = vmul.f32 %v120, 5.656854
    %v129 = vmul.f32 %v125, 5.656854
    %130 = vst.msk [vmem:[#allocation5] sm:$0xff] %vm46, %v128
    %131 = vst.msk [vmem:[#allocation5 + $0x8] sm:$0xff] %vm46, %v129
    // Predicated region
    $region14: #{tpu_custom_call.1} parent=1 // pred_check
      _
    $region15: #{tpu_custom_call.1} parent=1 // pred_check_branch
      %133 = sbr.rel (0) target = $region17
    $region16: #{tpu_custom_call.1} parent=1 // pred_region
      %s135 = ssub.s32 256, 256
      %136 = vsyncadd [#allocation4], %s135
      %s137 = sshll.u32 [#allocation5], 4
      %s138 = int_to_ptr.vmem [resolvable:$true] %s137
      %143 = dma.vmem_to_hbm [thread:$0]  %s138, 256, %s2, [#allocation4], 128, 128, 8
    $region17: #{tpu_custom_call.1} parent=1 // pred_fallthru
      _
    // Predicated region
    $region18: #{tpu_custom_call.1} parent=1 // pred_check
      _
    $region19: #{tpu_custom_call.1} parent=1 // pred_check_branch
      %145 = sbr.rel (0) target = $region21
    $region20: #{tpu_custom_call.1} parent=1 // pred_region
      %146 = dma.done [#allocation4], 256
    $region21: #{tpu_custom_call.1} parent=1 // pred_fallthru
      _
    %147 = vsyncpa [#allocation3], 1
    %148 = vsyncpa [#allocation4], 1

</llo_original>
